<compile_context>
chip_gen: v7x
topology: tpu7x:2x2x1
jax: 0.10.0
libtpu: 0.0.40
codegen_flags: <defaults>
</compile_context>

<pallas_src>
import functools

import jax
import jax.numpy as jnp
from jax import lax
from jax.experimental import pallas as pl
from jax.experimental.pallas import tpu as pltpu


def _focal_kernel(logits_ref, targets_ref, out_ref, *, n_rows, block_rows,
                  alpha, gamma, mask_rows):
    logits = logits_ref[...].astype(jnp.float32)   # (TN, C), f32 math in-kernel
    tgt = targets_ref[...]                         # (TN, 1) int32
    tn, c = logits.shape

    # Numerically stable log-sum-exp per row (log-softmax denominator).
    m = jnp.max(logits, axis=-1, keepdims=True)                                  # (TN,1)
    lse = m + jnp.log(jnp.sum(jnp.exp(logits - m), axis=-1, keepdims=True))      # (TN,1)

    # logit[target] via predicated select (avoids materializing a float one-hot).
    class_ids = lax.broadcasted_iota(jnp.int32, (tn, c), 1)
    picked = jnp.sum(jnp.where(class_ids == tgt, logits, 0.0),
                     axis=-1, keepdims=True)                                     # (TN,1)

    ce = lse - picked                      # per-sample cross entropy
    pt = jnp.exp(-ce)
    omp = jnp.maximum(1.0 - pt, 0.0)       # clamp tiny negative rounding noise
    if gamma == 2.0:                       # default gamma: avoid pow lowering
        factor = omp * omp
    else:
        factor = omp ** gamma
    focal = alpha * factor * ce            # (TN, 1)

    if mask_rows:
        # Last tile may overhang N: padded rows hold garbage reads -> zero them
        # (their output writes are also dropped by Pallas boundary masking).
        row = pl.program_id(0) * block_rows + lax.broadcasted_iota(
            jnp.int32, (tn, 1), 0)
        focal = jnp.where(row < n_rows, focal, 0.0)

    out_ref[...] = focal.astype(out_ref.dtype)


def _round_up(x, m):
    return ((x + m - 1) // m) * m


def _pick_block_rows(n, c, itemsize, requested=None,
                     vmem_bytes_per_input=8 * 1024 * 1024):
    """Biggest multiple-of-8 row tile whose double-buffered logits block fits
    the VMEM budget; never larger than N rounded up to 8 sublanes."""
    if requested is None:
        tn = vmem_bytes_per_input // max(1, 2 * c * itemsize)  # x2: double buffer
        tn = min(tn, 1024)
    else:
        tn = requested
    tn = min(tn, _round_up(n, 8))
    return max(8, (tn // 8) * 8)


def focal_loss(logits, targets, *, alpha=0.25, gamma=2.0, reduction="mean",
               block_rows=None):
    """Pallas-backed equivalent of FocalLoss.forward."""
    n, c = logits.shape
    itemsize = jnp.dtype(logits.dtype).itemsize
    tn = _pick_block_rows(n, c, itemsize, block_rows)
    num_tiles = pl.cdiv(n, tn)

    targets_2d = targets.astype(jnp.int32).reshape(n, 1)

    kernel = functools.partial(
        _focal_kernel, n_rows=n, block_rows=tn, alpha=float(alpha),
        gamma=float(gamma), mask_rows=(n % tn != 0))

    # TODO(synk): for very large C (LLM-sized vocab) add a second grid axis over
    # C with an online/streaming LSE; this version assumes a (TN, C) row tile
    # fits the per-generation VMEM budget.
    per_sample = pl.pallas_call(
        kernel,
        out_shape=jax.ShapeDtypeStruct((n, 1), jnp.float32),
        grid=(num_tiles,),
        in_specs=[
            pl.BlockSpec((tn, c), lambda i: (i, 0)),   # logits, native dtype
            pl.BlockSpec((tn, 1), lambda i: (i, 0)),   # targets
        ],
        out_specs=pl.BlockSpec((tn, 1), lambda i: (i, 0)),
        compiler_params=pltpu.CompilerParams(
            dimension_semantics=("parallel",)),
    )(logits, targets_2d)[:, 0]

    if reduction == "mean":
        return per_sample.mean()
    if reduction == "sum":
        return per_sample.sum()
    return per_sample


def _reference(logits_f32, targets, alpha, gamma):
    logp = jax.nn.log_softmax(logits_f32, axis=-1)
    ce = -jnp.take_along_axis(logp, targets[:, None], axis=-1)[:, 0]
    pt = jnp.exp(-ce)
    return jnp.mean(alpha * (1.0 - pt) ** gamma * ce)


if __name__ == "__main__":
    key = jax.random.PRNGKey(0)
    k1, k2 = jax.random.split(key)

    N, C = 40, 32
    ALPHA, GAMMA = 0.25, 2.0

    logits = jax.random.normal(k1, (N, C), dtype=jnp.float32)
    targets = jax.random.randint(k2, (N,), 0, C, dtype=jnp.int32)

    # 1) f32 logits, explicit small row tile -> 5-step grid.
    loss = focal_loss(logits, targets, alpha=ALPHA, gamma=GAMMA,
                      reduction="mean", block_rows=8)
    jax.block_until_ready(loss)
    ref = _reference(logits, targets, ALPHA, GAMMA)
    assert jnp.allclose(loss, ref, rtol=1e-4, atol=1e-5), (loss, ref)

    # 2) bf16 logits streamed in native dtype, auto tile size.
    logits_bf16 = logits.astype(jnp.bfloat16)
    loss_bf16 = focal_loss(logits_bf16, targets, alpha=ALPHA, gamma=GAMMA,
                           reduction="mean")
    jax.block_until_ready(loss_bf16)
    ref_bf16 = _reference(logits_bf16.astype(jnp.float32), targets, ALPHA, GAMMA)
    assert jnp.allclose(loss_bf16, ref_bf16, rtol=1e-2, atol=1e-4), (
        loss_bf16, ref_bf16)

    print("KERNEL_OK")
</pallas_src>

<mosaic_0001>
module attributes {stable_mosaic.version = 11 : i64} {
  func.func @_focal_kernel(%arg0: i32, %arg1: memref<8x32xf32, #tpu.memory_space<vmem>>, %arg2: memref<8x1xi32, #tpu.memory_space<vmem>>, %arg3: memref<8x1xf32, #tpu.memory_space<vmem>>) attributes {dimension_semantics = [#tpu.dimension_semantics<parallel>], iteration_bounds = array<i64: 5>, scalar_prefetch = 0 : i64, scratch_operands = 0 : i64, tpu.core_type = #tpu.core_type<tc>, window_params = [{transform_indices = @transform_0, window_bounds = array<i64: 8, 32>}, {transform_indices = @transform_1, window_bounds = array<i64: 8, 1>}, {transform_indices = @transform_2, window_bounds = array<i64: 8, 1>}]} {
    %c0 = arith.constant 0 : index
    %c0_0 = arith.constant 0 : index
    %0 = vector.load %arg1[%c0, %c0_0] : memref<8x32xf32, #tpu.memory_space<vmem>>, vector<8x32xf32>
    %c0_1 = arith.constant 0 : index
    %c0_2 = arith.constant 0 : index
    %1 = vector.load %arg2[%c0_1, %c0_2] : memref<8x1xi32, #tpu.memory_space<vmem>>, vector<8x1xi32>
    %cst = arith.constant dense<0xFF800000> : vector<8xf32>
    %2 = vector.multi_reduction <maximumf>, %0, %cst [1] : vector<8x32xf32> to vector<8xf32>
    %3 = vector.shape_cast %2 : vector<8xf32> to vector<8x1xf32>
    %4 = vector.broadcast %3 : vector<8x1xf32> to vector<8x32xf32>
    %5 = arith.subf %0, %4 : vector<8x32xf32>
    %6 = math.exp %5 : vector<8x32xf32>
    %cst_3 = arith.constant dense<0.000000e+00> : vector<8xf32>
    %7 = vector.multi_reduction <add>, %6, %cst_3 [1] : vector<8x32xf32> to vector<8xf32>
    %8 = vector.shape_cast %7 : vector<8xf32> to vector<8x1xf32>
    %9 = math.log %8 : vector<8x1xf32>
    %10 = arith.addf %3, %9 : vector<8x1xf32>
    %11 = tpu.iota {dimensions = array<i32: 1>} : vector<8x32xi32>
    %12 = vector.broadcast %1 : vector<8x1xi32> to vector<8x32xi32>
    %13 = arith.cmpi eq, %11, %12 : vector<8x32xi32>
    %cst_4 = arith.constant 0.000000e+00 : f32
    %14 = vector.broadcast %cst_4 : f32 to vector<8x32xf32>
    %15 = arith.select %13, %0, %14 : vector<8x32xi1>, vector<8x32xf32>
    %cst_5 = arith.constant dense<0.000000e+00> : vector<8xf32>
    %16 = vector.multi_reduction <add>, %15, %cst_5 [1] : vector<8x32xf32> to vector<8xf32>
    %17 = vector.shape_cast %16 : vector<8xf32> to vector<8x1xf32>
    %18 = arith.subf %10, %17 : vector<8x1xf32>
    %cst_6 = arith.constant 0.000000e+00 : f32
    %19 = vector.broadcast %cst_6 : f32 to vector<8x1xf32>
    %20 = arith.subf %19, %18 : vector<8x1xf32>
    %21 = math.exp %20 : vector<8x1xf32>
    %cst_7 = arith.constant 1.000000e+00 : f32
    %22 = vector.broadcast %cst_7 : f32 to vector<8x1xf32>
    %23 = arith.subf %22, %21 : vector<8x1xf32>
    %cst_8 = arith.constant 0.000000e+00 : f32
    %24 = vector.broadcast %cst_8 : f32 to vector<8x1xf32>
    %25 = arith.maximumf %23, %24 : vector<8x1xf32>
    %26 = arith.mulf %25, %25 : vector<8x1xf32>
    %cst_9 = arith.constant 2.500000e-01 : f32
    %27 = vector.broadcast %cst_9 : f32 to vector<8x1xf32>
    %28 = arith.mulf %27, %26 : vector<8x1xf32>
    %29 = arith.mulf %28, %18 : vector<8x1xf32>
    %c0_10 = arith.constant 0 : index
    %c0_11 = arith.constant 0 : index
    %30 = vector.load %arg3[%c0_10, %c0_11] : memref<8x1xf32, #tpu.memory_space<vmem>>, vector<8x1xf32>
    tpu.vector_store %arg3[%c0_10, %c0_11], %29 {strides = array<i32>} : memref<8x1xf32, #tpu.memory_space<vmem>>, vector<8x1xf32>,
    return
  }
  func.func @transform_0(%arg0: i32) -> (i32, i32) {
    %c0_i32 = arith.constant 0 : i32
    %c0_i32_0 = arith.constant 0 : i32
    return %arg0, %c0_i32 : i32, i32
  }
  func.func @transform_1(%arg0: i32) -> (i32, i32) {
    %c0_i32 = arith.constant 0 : i32
    %c0_i32_0 = arith.constant 0 : i32
    return %arg0, %c0_i32 : i32, i32
  }
  func.func @transform_2(%arg0: i32) -> (i32, i32) {
    %c0_i32 = arith.constant 0 : i32
    %c0_i32_0 = arith.constant 0 : i32
    return %arg0, %c0_i32 : i32, i32
  }
}

</mosaic_0001>

<llo_original>
// kernel: tpu_custom_call.1
$region0: #{tpu_custom_call.1}
  #allocation0 [shape = 'u32[]', space=smem, size = 0x4, offset = 0x4, fixed_abs, tag = 'smem constant byte address 0x4 - core index']
  #allocation1 [shape = 'u32[144,128]{1,0:T(1,128)}', space=vmem, size = 0x12000, scoped, tag = 'internal scratch']
  %s0 = inlined_call_operand.vmem [shape: f32[40,32], index: 0, kind: input, shape index: {}]
  %s1 = inlined_call_operand.vmem [shape: s32[40,1], index: 1, kind: input, shape index: {}]
  %s2 = inlined_call_operand.vmem [shape: f32[40,1], index: 2, kind: output, shape index: {}]
  %s3 = sld [smem:[#allocation0]]
  $region41: #{tpu_custom_call.1} parent=0
    _
  %s5 = ssub.s32 1, %s3
  %s6 = scalar_select 0, %s5, %s3
  loop: start=0, step=1, limit=7
  $region2: #{tpu_custom_call.1} parent=0 // loop_pre_header
    _
  $region3: #{tpu_custom_call.1} parent=0 // loop_header
    %s8 = sphi 0, %s12
    %p9 = scmp.ge.s32.totalorder %s8, 7
    %s18 = sphi 0, %s20
    %s21 = sphi 0, %s18
    %s22 = sphi 0, %s21
    %s38 = sphi 0, %s22
    %s44 = sphi 0, %s46
    %s47 = sphi 0, %s44
    %s48 = sphi 0, %s47
    %s64 = sphi 0, %s48
    %s70 = sphi 0, %s72
    %s73 = sphi 0, %s70
    %s74 = sphi 0, %s73
    %s90 = sphi 0, %s74
  $region4: #{tpu_custom_call.1} parent=0 // loop_header_branch
    %11 = sbr.rel (%p9) target = $region8
  $region5: #{tpu_custom_call.1} parent=0 // loop_body
    %s13 = ssub.s32 %s8, 1
    %s14 = ssub.s32 %s8, 2
    %s15 = sadd.s32 %s8, 1
    %s16 = ssub.s32 %s8, %s15
    %p17 = scmp.eq.s32.totalorder %s16, 0
    %s19 = sadd.s32 %s18, 1
    %s20 = scalar_select %p17, %s18, %s19
    %p23 = pneg %p17
    %p24 = scmp.eq.s32.totalorder %s8, 4
    %p25 = por %p23, %p24
    %p26 = scmp.ne.s32.totalorder %s18, %s21
    %p27 = scmp.eq.s32.totalorder %s8, 0
    %p28 = por %p26, %p27
    %p29 = scmp.ne.s32.totalorder %s18, %s21
    %p30 = scmp.eq.s32.totalorder %s13, 4
    %p31 = por %p29, %p30
    %p32 = scmp.ne.s32.totalorder %s21, %s22
    %p33 = scmp.eq.s32.totalorder %s13, 0
    %p34 = por %p32, %p33
    %p35 = scmp.ne.s32.totalorder %s21, %s22
    %p36 = scmp.eq.s32.totalorder %s14, 4
    %p37 = por %p35, %p36
    %p39 = scmp.ne.s32.totalorder %s22, %s38
    %p40 = scmp.eq.s32.totalorder %s14, 0
    %p41 = por %p39, %p40
    %s42 = ssub.s32 %s8, %s15
    %p43 = scmp.eq.s32.totalorder %s42, 0
    %s45 = sadd.s32 %s44, 1
    %s46 = scalar_select %p43, %s44, %s45
    %p49 = pneg %p43
    %p50 = scmp.eq.s32.totalorder %s8, 4
    %p51 = por %p49, %p50
    %p52 = scmp.ne.s32.totalorder %s44, %s47
    %p53 = scmp.eq.s32.totalorder %s8, 0
    %p54 = por %p52, %p53
    %p55 = scmp.ne.s32.totalorder %s44, %s47
    %p56 = scmp.eq.s32.totalorder %s13, 4
    %p57 = por %p55, %p56
    %p58 = scmp.ne.s32.totalorder %s47, %s48
    %p59 = scmp.eq.s32.totalorder %s13, 0
    %p60 = por %p58, %p59
    %p61 = scmp.ne.s32.totalorder %s47, %s48
    %p62 = scmp.eq.s32.totalorder %s14, 4
    %p63 = por %p61, %p62
    %p65 = scmp.ne.s32.totalorder %s48, %s64
    %p66 = scmp.eq.s32.totalorder %s14, 0
    %p67 = por %p65, %p66
    %s68 = ssub.s32 %s8, %s15
    %p69 = scmp.eq.s32.totalorder %s68, 0
    %s71 = sadd.s32 %s70, 1
    %s72 = scalar_select %p69, %s70, %s71
    %p75 = pneg %p69
    %p76 = scmp.eq.s32.totalorder %s8, 4
    %p77 = por %p75, %p76
    %p78 = scmp.ne.s32.totalorder %s70, %s73
    %p79 = scmp.eq.s32.totalorder %s8, 0
    %p80 = por %p78, %p79
    %p81 = scmp.ne.s32.totalorder %s70, %s73
    %p82 = scmp.eq.s32.totalorder %s13, 4
    %p83 = por %p81, %p82
    %p84 = scmp.ne.s32.totalorder %s73, %s74
    %p85 = scmp.eq.s32.totalorder %s13, 0
    %p86 = por %p84, %p85
    %p87 = scmp.ne.s32.totalorder %s73, %s74
    %p88 = scmp.eq.s32.totalorder %s14, 4
    %p89 = por %p87, %p88
    %p91 = scmp.ne.s32.totalorder %s74, %s90
    %p92 = scmp.eq.s32.totalorder %s14, 0
    %p93 = por %p91, %p92
    %p94 = scmp.le.s32.totalorder 1, %s8
    %p95 = scmp.lt.s32.totalorder %s8, 6
    %p96 = pnand %p94, %p95
    %p97 = pneg %p96
    // Predicated region
    $region9: #{tpu_custom_call.1} parent=5 // pred_check
      _
    $region10: #{tpu_custom_call.1} parent=5 // pred_check_branch
      %99 = sbr.rel (%p96) target = $region12
    $region11: #{tpu_custom_call.1} parent=5 // pred_region
      %s100 = ssub.s32 %s8, 1
    $region12: #{tpu_custom_call.1} parent=5 // pred_fallthru
      _
    %p101 = scmp.lt.s32.totalorder %s8, 5
    // Predicated region
    $region13: #{tpu_custom_call.1} parent=5 // pred_check
      %p102 = pneg %p101
    $region14: #{tpu_custom_call.1} parent=5 // pred_check_branch
      %104 = sbr.rel (%p102) target = $region16
    $region15: #{tpu_custom_call.1} parent=5 // pred_region
      // Predicated region
      $region17: #{tpu_custom_call.1} parent=15 // pred_check
        %p105 = pneg %p28
      $region18: #{tpu_custom_call.1} parent=15 // pred_check_branch
        %107 = sbr.rel (%p105) target = $region20
      $region19: #{tpu_custom_call.1} parent=15 // pred_region
        %p108 = scmp.lt.s32.totalorder %s8, 4
        %s109 = scalar_select %p108, %s8, 4
        %s110 = smul.addr %s109, 8
        %s111 = scalar_lea.vmem %s0, %s110
      $region20: #{tpu_custom_call.1} parent=15 // pred_fallthru
        _
      // Predicated region
      $region21: #{tpu_custom_call.1} parent=15 // pred_check
        %p112 = pneg %p54
      $region22: #{tpu_custom_call.1} parent=15 // pred_check_branch
        %114 = sbr.rel (%p112) target = $region24
      $region23: #{tpu_custom_call.1} parent=15 // pred_region
        %p115 = scmp.lt.s32.totalorder %s8, 4
        %s116 = scalar_select %p115, %s8, 4
        %s117 = smul.addr %s116, 8
        %s118 = scalar_lea.vmem %s1, %s117
      $region24: #{tpu_custom_call.1} parent=15 // pred_fallthru
        _
    $region16: #{tpu_custom_call.1} parent=5 // pred_fallthru
      _
    %p119 = scmp.le.s32.totalorder 1, %s8
    %p120 = scmp.lt.s32.totalorder %s8, 6
    %p121 = pnand %p119, %p120
    %p122 = pneg %p121
    // Predicated region
    $region25: #{tpu_custom_call.1} parent=5 // pred_check
      _
    $region26: #{tpu_custom_call.1} parent=5 // pred_check_branch
      %124 = sbr.rel (%p121) target = $region28
    $region27: #{tpu_custom_call.1} parent=5 // pred_region
      %s125 = ssub.s32 %s8, 1
      %p126 = scmp.lt.s32.totalorder %s13, 4
      %s127 = scalar_select %p126, %s13, 4
      %s128 = smul.addr %s127, 8
      %s129 = scalar_lea.vmem %s0, %s128
      %p130 = pneg %p34
      %p131 = pneg %p31
      %p132 = scmp.lt.s32.totalorder %s13, 4
      %s133 = scalar_select %p132, %s13, 4
      %s134 = smul.addr %s133, 8
      %s135 = scalar_lea.vmem %s1, %s134
      %p136 = pneg %p60
      %p137 = pneg %p57
      %p138 = pneg %p86
      %p139 = pneg %p83
      %p140 = scmp.lt.s32.totalorder %s13, 4
      %s141 = scalar_select %p140, %s13, 4
      %s142 = smul.addr %s141, 8
      %s143 = scalar_lea.vmem %s2, %s142
      %p144 = scmp.lt.s32.totalorder %s13, 4
      %s145 = scalar_select %p144, %s13, 4
      %s146 = smul.addr %s145, 8
      %s147 = scalar_lea.vmem %s0, %s146
      %p148 = scmp.lt.s32.totalorder %s13, 4
      %s149 = scalar_select %p148, %s13, 4
      %s150 = smul.addr %s149, 8
      %s151 = scalar_lea.vmem %s1, %s150
      %p152 = scmp.lt.s32.totalorder %s13, 4
      %s153 = scalar_select %p152, %s13, 4
      %s154 = smul.addr %s153, 8
      %s155 = scalar_lea.vmem %s2, %s154
      %v156 = vld [vmem:[%s147] sm:$0xff]
      %v157 = vld [vmem:[%s151] sm:$0xff]
      %vm158 = vcmask 261120
      %v159 = vsel %vm158, %v156, -inf
      %160 = vmax.xlane.f32.xlu0 %v159
      %v161 = vpop.xlane.xlu0 %160
      %v162 = vsub.f32 %v156, %v161
      %v163 = vmul.f32 %v162, 1.442695
      %v164 = vpow.pop %v163
      %v165 = vsel %vm158, %v164, 0.0
      %166 = vadd.xlane.f32.xlu0 %v165
      %v167 = vpop.xlane.xlu0 %166
      %v168 = vlog2.pop %v167
      %v169 = vmul.f32 %v168, 0.6931472
      %v170 = vadd.f32 %v161, %v169
      %v171 = vlaneseq
      %v172 = vand.u32 %v171, 127
      %173 = vset.pattern.permute.xlu0 0
      %174 = vperm.xlu0 %173, %v157
      %v175 = vpop.permute.xlu0 %174
      %vm176 = vcmp.eq.s32.totalorder %v172, %v175
      %v177 = vsel %vm176, %v156, 0.0
      %v178 = vsel %vm158, %v177, 0.0
      %179 = vadd.xlane.f32.xlu0 %v178
      %v180 = vpop.xlane.xlu0 %179
      %v181 = vsub.f32 %v170, %v180
      %v182 = vsub.f32 0.0, %v181
      %v183 = vmul.f32 %v182, 1.442695
      %v184 = vpow.pop %v183
      %v185 = vsub.f32 1.0, %v184
      %v186 = vmax.f32 %v185, 0.0
      %v187 = vmul.f32 %v186, %v186
      %v188 = vmul.f32 %v187, 0.25
      %v189 = vmul.f32 %v188, %v181
      %vm190 = vcmask 7168
      %191 = vst.msk [vmem:[%s155] sm:$0xff] %vm190, %v189
      %p192 = scmp.lt.s32.totalorder %s13, 4
      %s193 = scalar_select %p192, %s13, 4
      %s194 = smul.addr %s193, 8
      %s195 = scalar_lea.vmem %s2, %s194
      // Predicated region
      $region29: #{tpu_custom_call.1} parent=27 // pred_check
        %p196 = pneg %p83
      $region30: #{tpu_custom_call.1} parent=27 // pred_check_branch
        %198 = sbr.rel (%p196) target = $region32
      $region31: #{tpu_custom_call.1} parent=27 // pred_region
        _
      $region32: #{tpu_custom_call.1} parent=27 // pred_fallthru
        _
    $region28: #{tpu_custom_call.1} parent=5 // pred_fallthru
      _
    %p199 = scmp.le.s32.totalorder 2, %s8
    // Predicated region
    $region33: #{tpu_custom_call.1} parent=5 // pred_check
      %p200 = pneg %p199
    $region34: #{tpu_custom_call.1} parent=5 // pred_check_branch
      %202 = sbr.rel (%p200) target = $region36
    $region35: #{tpu_custom_call.1} parent=5 // pred_region
      %s203 = ssub.s32 %s8, 2
      // Predicated region
      $region37: #{tpu_custom_call.1} parent=35 // pred_check
        %p204 = pneg %p89
      $region38: #{tpu_custom_call.1} parent=35 // pred_check_branch
        %206 = sbr.rel (%p204) target = $region40
      $region39: #{tpu_custom_call.1} parent=35 // pred_region
        %p207 = scmp.lt.s32.totalorder %s14, 4
        %s208 = scalar_select %p207, %s14, 4
        %s209 = smul.addr %s208, 8
        %s210 = scalar_lea.vmem %s2, %s209
      $region40: #{tpu_custom_call.1} parent=35 // pred_fallthru
        _
    $region36: #{tpu_custom_call.1} parent=5 // pred_fallthru
      _
  $region6: #{tpu_custom_call.1} parent=0 // loop_footer
    %s12 = sadd.s32 1, %s8
  $region7: #{tpu_custom_call.1} parent=0 // loop_footer_branch
    %7 = sbr.rel target = $region3
  $region8: #{tpu_custom_call.1} parent=0 // loop_exit
    _

</llo_original>
